<compile_context>
chip_gen: v7x
topology: tpu7x:2x2x1
jax: 0.10.0
libtpu: 0.0.40
codegen_flags: <defaults>
</compile_context>

<pallas_src>
import functools

import jax
import jax.numpy as jnp
from jax.experimental import pallas as pl
from jax.experimental.pallas import tpu as pltpu

EPS = 1e-6


def _sublayer_connection_kernel(x_full_ref, x_cols_ref, a2_ref, b2_ref,
                                w_ref, bias_ref, *rest,
                                rate, use_mask, hidden):
    if use_mask:
        mask_ref, o_ref, normed_ref = rest
    else:
        o_ref, normed_ref = rest
        mask_ref = None

    j = pl.program_id(1)

    # ---- LayerNorm over the full hidden dim, once per row tile ----------------
    # Computed at the first column tile and cached (bf16) for all later j.
    @pl.when(j == 0)
    def _():
        x = x_full_ref[...].astype(jnp.float32)
        mean = jnp.mean(x, axis=-1, keepdims=True)
        centered = x - mean
        # Unbiased variance (divide by D-1), eps added to std — matches torch x.std(-1).
        var = jnp.sum(centered * centered, axis=-1, keepdims=True) * (1.0 / (hidden - 1))
        inv_std = 1.0 / (jnp.sqrt(var) + EPS)          # one divide per row, then multiply
        normed = a2_ref[...] * (centered * inv_std) + b2_ref[...]
        normed_ref[...] = normed.astype(jnp.bfloat16)

    # ---- sublayer: Linear(hidden, hidden), bf16 MXU matmul, f32 accumulate ----
    h = jnp.dot(normed_ref[...], w_ref[...], preferred_element_type=jnp.float32)
    h = h + bias_ref[...]

    # ---- dropout (training only): precomputed keep-mask, inverted scaling -----
    if use_mask:
        h = h * (mask_ref[...] * (1.0 / (1.0 - rate)))

    # ---- residual add ----------------------------------------------------------
    o_ref[...] = (x_cols_ref[...].astype(jnp.float32) + h).astype(o_ref.dtype)


def sublayer_connection(x, a2, b2, w, bias, *, dropout_rate=0.1, training=False,
                        rng_key=None, tile_rows=256, tile_cols=512):
    """x: (B, T, D); a2/b2/bias: (D,); w: (D, D)."""
    B, T, D = x.shape
    N = B * T
    out_dtype = x.dtype

    use_mask = bool(training) and float(dropout_rate) > 0.0
    if use_mask:
        assert 0.0 <= float(dropout_rate) < 1.0, "dropout_rate must be in [0, 1)"

    # Row tiling: use large tiles; pad the row count up to a tile multiple.
    tm = tile_rows if N >= tile_rows else max(8, ((N + 7) // 8) * 8)
    n_pad = (-N) % tm
    N_pad = N + n_pad

    # Column tiling of the Linear output: keeps only a (D, tn) weight slab in VMEM
    # (scales to large D on v7x's 64 MiB VMEM). LayerNorm always sees the full hidden dim.
    if D % tile_cols == 0 and tile_cols % 128 == 0 and D > tile_cols:
        tn = tile_cols
    else:
        tn = D

    x2 = x.reshape(N, D)
    if n_pad:
        x2 = jnp.concatenate([x2, jnp.zeros((n_pad, D), x2.dtype)], axis=0)

    a2_2 = a2.reshape(1, D).astype(jnp.float32)
    b2_2 = b2.reshape(1, D).astype(jnp.float32)
    bias2 = bias.reshape(1, D).astype(jnp.float32)
    w_bf16 = w.astype(jnp.bfloat16)   # bf16 weights: higher MXU throughput, half the VMEM

    grid = (N_pad // tm, D // tn)

    in_specs = [
        pl.BlockSpec((tm, D), lambda i, j: (i, 0)),    # x, full hidden (LayerNorm input)
        pl.BlockSpec((tm, tn), lambda i, j: (i, j)),   # x, column slab (residual add)
        pl.BlockSpec((1, D), lambda i, j: (0, 0)),     # a_2
        pl.BlockSpec((1, D), lambda i, j: (0, 0)),     # b_2
        pl.BlockSpec((D, tn), lambda i, j: (0, j)),    # W column slab
        pl.BlockSpec((1, tn), lambda i, j: (0, j)),    # bias column slab
    ]
    args = [x2, x2, a2_2, b2_2, w_bf16, bias2]

    if use_mask:
        if rng_key is None:
            rng_key = jax.random.PRNGKey(0)
        keep = jax.random.bernoulli(rng_key, 1.0 - float(dropout_rate), (N_pad, D))
        args.append(keep.astype(jnp.float32))
        in_specs.append(pl.BlockSpec((tm, tn), lambda i, j: (i, j)))

    kernel = functools.partial(
        _sublayer_connection_kernel,
        rate=float(dropout_rate), use_mask=use_mask, hidden=D)

    out = pl.pallas_call(
        kernel,
        out_shape=jax.ShapeDtypeStruct((N_pad, D), out_dtype),
        grid_spec=pltpu.PrefetchScalarGridSpec(
            num_scalar_prefetch=0,
            grid=grid,
            in_specs=in_specs,
            out_specs=pl.BlockSpec((tm, tn), lambda i, j: (i, j)),
            scratch_shapes=[pltpu.VMEM((tm, D), jnp.bfloat16)],   # cached LayerNorm(x)
        ),
        compiler_params=pltpu.CompilerParams(
            dimension_semantics=("parallel", "arbitrary"),
            vmem_limit_bytes=48 * 1024 * 1024,
        ),
    )(*args)

    if n_pad:
        out = out[:N]
    return out.reshape(B, T, D)


def ref_forward_eval(x, a2, b2, w, bias, *, matmul_dtype=jnp.float32):
    """Pure-JAX reference: x + Linear(LayerNorm(x)); dropout in eval mode (identity)."""
    mean = x.mean(-1, keepdims=True)
    centered = x - mean
    std = jnp.sqrt((centered ** 2).sum(-1, keepdims=True) / (x.shape[-1] - 1))
    normed = a2 * centered / (std + EPS) + b2
    h = jnp.dot(normed.reshape(-1, x.shape[-1]).astype(matmul_dtype),
                w.astype(matmul_dtype), preferred_element_type=jnp.float32)
    return x + (h.reshape(x.shape) + bias)


if __name__ == "__main__":
    B, T, D = 2, 8, 128   # batch=2, seq=8, hidden=128 (lane-dense: D % 128 == 0)
    key = jax.random.PRNGKey(0)
    kx, kw, kb, kdrop = jax.random.split(key, 4)

    x = jax.random.normal(kx, (B, T, D), dtype=jnp.float32)

    # LayerNorm params (nn.Parameter(torch.ones/zeros(size)))
    a2 = jnp.ones((D,), dtype=jnp.float32)
    b2 = jnp.zeros((D,), dtype=jnp.float32)
    # Deterministic synthetic sublayer = Linear(D, D)
    w = jax.random.normal(kw, (D, D), dtype=jnp.float32) / jnp.sqrt(D)
    bias = jax.random.normal(kb, (D,), dtype=jnp.float32) * 0.01

    # ---- eval mode (dropout == identity): check against references ------------
    out_eval = sublayer_connection(x, a2, b2, w, bias,
                                   dropout_rate=0.1, training=False)
    out_eval = jax.block_until_ready(out_eval)
    assert out_eval.shape == x.shape and out_eval.dtype == x.dtype

    ref_bf16 = ref_forward_eval(x, a2, b2, w, bias, matmul_dtype=jnp.bfloat16)
    ref_f32 = ref_forward_eval(x, a2, b2, w, bias, matmul_dtype=jnp.float32)
    assert jnp.allclose(out_eval, ref_bf16, atol=2e-3, rtol=2e-3), \
        "mismatch vs precision-matched reference"
    assert jnp.allclose(out_eval, ref_f32, atol=5e-2, rtol=5e-2), \
        "mismatch vs f32 module reference"

    # ---- training mode (precomputed dropout mask applied in-kernel) -----------
    out_train = sublayer_connection(x, a2, b2, w, bias,
                                    dropout_rate=0.1, training=True, rng_key=kdrop)
    out_train = jax.block_until_ready(out_train)
    assert out_train.shape == x.shape
    assert bool(jnp.all(jnp.isfinite(out_train)))
    # Dropped positions collapse to the pure residual: out == x exactly there.
    assert bool(jnp.any(out_train == x))

    print("KERNEL_OK")
</pallas_src>

<mosaic_0001>
module attributes {stable_mosaic.version = 11 : i64} {
  func.func @_sublayer_connection_kernel(%arg0: i32, %arg1: i32, %arg2: memref<16x128xf32, #tpu.memory_space<vmem>>, %arg3: memref<16x128xf32, #tpu.memory_space<vmem>>, %arg4: memref<1x128xf32, #tpu.memory_space<vmem>>, %arg5: memref<1x128xf32, #tpu.memory_space<vmem>>, %arg6: memref<128x128xbf16, #tpu.memory_space<vmem>>, %arg7: memref<1x128xf32, #tpu.memory_space<vmem>>, %arg8: memref<16x128xf32, #tpu.memory_space<vmem>>, %arg9: memref<16x128xbf16, #tpu.memory_space<vmem>>) attributes {dimension_semantics = [#tpu.dimension_semantics<parallel>, #tpu.dimension_semantics<arbitrary>], iteration_bounds = array<i64: 1, 1>, scalar_prefetch = 0 : i64, scratch_operands = 1 : i64, tpu.core_type = #tpu.core_type<tc>, window_params = [{transform_indices = @transform_0, window_bounds = array<i64: 16, 128>}, {transform_indices = @transform_1, window_bounds = array<i64: 16, 128>}, {pipeline_mode = #tpu.pipeline_mode<synchronous>, transform_indices = @transform_2, window_bounds = array<i64: 1, 128>}, {pipeline_mode = #tpu.pipeline_mode<synchronous>, transform_indices = @transform_3, window_bounds = array<i64: 1, 128>}, {transform_indices = @transform_4, window_bounds = array<i64: 128, 128>}, {transform_indices = @transform_5, window_bounds = array<i64: 1, 128>}, {transform_indices = @transform_6, window_bounds = array<i64: 16, 128>}]} {
    %c0_i32 = arith.constant 0 : i32
    %0 = arith.cmpi eq, %arg1, %c0_i32 : i32
    %1 = arith.extui %0 : i1 to i32
    %c0_i32_0 = arith.constant 0 : i32
    %2 = arith.cmpi ne, %1, %c0_i32_0 : i32
    scf.if %2 {
      %c0_10 = arith.constant 0 : index
      %c0_11 = arith.constant 0 : index
      %12 = vector.load %arg2[%c0_10, %c0_11] : memref<16x128xf32, #tpu.memory_space<vmem>>, vector<16x128xf32>
      %cst_12 = arith.constant dense<0.000000e+00> : vector<16xf32>
      %13 = vector.multi_reduction <add>, %12, %cst_12 [1] : vector<16x128xf32> to vector<16xf32>
      %14 = vector.shape_cast %13 : vector<16xf32> to vector<16x1xf32>
      %cst_13 = arith.constant 1.280000e+02 : f32
      %15 = vector.broadcast %cst_13 : f32 to vector<16x1xf32>
      %16 = arith.divf %14, %15 : vector<16x1xf32>
      %17 = vector.broadcast %16 : vector<16x1xf32> to vector<16x128xf32>
      %18 = arith.subf %12, %17 : vector<16x128xf32>
      %19 = arith.mulf %18, %18 : vector<16x128xf32>
      %cst_14 = arith.constant dense<0.000000e+00> : vector<16xf32>
      %20 = vector.multi_reduction <add>, %19, %cst_14 [1] : vector<16x128xf32> to vector<16xf32>
      %21 = vector.shape_cast %20 : vector<16xf32> to vector<16x1xf32>
      %cst_15 = arith.constant 0.00787401571 : f32
      %22 = vector.broadcast %cst_15 : f32 to vector<16x1xf32>
      %23 = arith.mulf %21, %22 : vector<16x1xf32>
      %24 = math.sqrt %23 : vector<16x1xf32>
      %cst_16 = arith.constant 9.99999997E-7 : f32
      %25 = vector.broadcast %cst_16 : f32 to vector<16x1xf32>
      %26 = arith.addf %24, %25 : vector<16x1xf32>
      %cst_17 = arith.constant 1.000000e+00 : f32
      %27 = vector.broadcast %cst_17 : f32 to vector<16x1xf32>
      %28 = arith.divf %27, %26 : vector<16x1xf32>
      %c0_18 = arith.constant 0 : index
      %c0_19 = arith.constant 0 : index
      %29 = vector.load %arg4[%c0_18, %c0_19] : memref<1x128xf32, #tpu.memory_space<vmem>>, vector<1x128xf32>
      %30 = vector.broadcast %28 : vector<16x1xf32> to vector<16x128xf32>
      %31 = arith.mulf %18, %30 : vector<16x128xf32>
      %32 = vector.broadcast %29 : vector<1x128xf32> to vector<16x128xf32>
      %33 = arith.mulf %32, %31 : vector<16x128xf32>
      %c0_20 = arith.constant 0 : index
      %c0_21 = arith.constant 0 : index
      %34 = vector.load %arg5[%c0_20, %c0_21] : memref<1x128xf32, #tpu.memory_space<vmem>>, vector<1x128xf32>
      %35 = vector.broadcast %34 : vector<1x128xf32> to vector<16x128xf32>
      %36 = arith.addf %33, %35 : vector<16x128xf32>
      %37 = arith.truncf %36 : vector<16x128xf32> to vector<16x128xbf16>
      %c0_22 = arith.constant 0 : index
      %c0_23 = arith.constant 0 : index
      %38 = vector.load %arg9[%c0_22, %c0_23] : memref<16x128xbf16, #tpu.memory_space<vmem>>, vector<16x128xbf16>
      tpu.vector_store %arg9[%c0_22, %c0_23], %37 {strides = array<i32>} : memref<16x128xbf16, #tpu.memory_space<vmem>>, vector<16x128xbf16>,
    } else {
    }
    %c0 = arith.constant 0 : index
    %c0_1 = arith.constant 0 : index
    %3 = vector.load %arg9[%c0, %c0_1] : memref<16x128xbf16, #tpu.memory_space<vmem>>, vector<16x128xbf16>
    %c0_2 = arith.constant 0 : index
    %c0_3 = arith.constant 0 : index
    %4 = vector.load %arg6[%c0_2, %c0_3] : memref<128x128xbf16, #tpu.memory_space<vmem>>, vector<128x128xbf16>
    %cst = arith.constant dense<0.000000e+00> : vector<16x128xf32>
    %5 = tpu.matmul %3, %4, %cst {dimension_numbers = #tpu.dot_dimension_numbers<[1], [0], [0], [1], [0, 0, 1, 1], [], []>} : vector<16x128xbf16>, vector<128x128xbf16>, vector<16x128xf32> -> vector<16x128xf32>
    %c0_4 = arith.constant 0 : index
    %c0_5 = arith.constant 0 : index
    %6 = vector.load %arg7[%c0_4, %c0_5] : memref<1x128xf32, #tpu.memory_space<vmem>>, vector<1x128xf32>
    %7 = vector.broadcast %6 : vector<1x128xf32> to vector<16x128xf32>
    %8 = arith.addf %5, %7 : vector<16x128xf32>
    %c0_6 = arith.constant 0 : index
    %c0_7 = arith.constant 0 : index
    %9 = vector.load %arg3[%c0_6, %c0_7] : memref<16x128xf32, #tpu.memory_space<vmem>>, vector<16x128xf32>
    %10 = arith.addf %9, %8 : vector<16x128xf32>
    %c0_8 = arith.constant 0 : index
    %c0_9 = arith.constant 0 : index
    %11 = vector.load %arg8[%c0_8, %c0_9] : memref<16x128xf32, #tpu.memory_space<vmem>>, vector<16x128xf32>
    tpu.vector_store %arg8[%c0_8, %c0_9], %10 {strides = array<i32>} : memref<16x128xf32, #tpu.memory_space<vmem>>, vector<16x128xf32>,
    return
  }
  func.func @transform_0(%arg0: i32, %arg1: i32) -> (i32, i32) {
    %c0_i32 = arith.constant 0 : i32
    %c0_i32_0 = arith.constant 0 : i32
    return %arg0, %c0_i32 : i32, i32
  }
  func.func @transform_1(%arg0: i32, %arg1: i32) -> (i32, i32) {
    %c0_i32 = arith.constant 0 : i32
    return %arg0, %arg1 : i32, i32
  }
  func.func @transform_2(%arg0: i32, %arg1: i32) -> (i32, i32) {
    %c0_i32 = arith.constant 0 : i32
    %c0_i32_0 = arith.constant 0 : i32
    %c0_i32_1 = arith.constant 0 : i32
    return %c0_i32, %c0_i32_0 : i32, i32
  }
  func.func @transform_3(%arg0: i32, %arg1: i32) -> (i32, i32) {
    %c0_i32 = arith.constant 0 : i32
    %c0_i32_0 = arith.constant 0 : i32
    %c0_i32_1 = arith.constant 0 : i32
    return %c0_i32, %c0_i32_0 : i32, i32
  }
  func.func @transform_4(%arg0: i32, %arg1: i32) -> (i32, i32) {
    %c0_i32 = arith.constant 0 : i32
    %c0_i32_0 = arith.constant 0 : i32
    return %c0_i32, %arg1 : i32, i32
  }
  func.func @transform_5(%arg0: i32, %arg1: i32) -> (i32, i32) {
    %c0_i32 = arith.constant 0 : i32
    %c0_i32_0 = arith.constant 0 : i32
    return %c0_i32, %arg1 : i32, i32
  }
  func.func @transform_6(%arg0: i32, %arg1: i32) -> (i32, i32) {
    %c0_i32 = arith.constant 0 : i32
    return %arg0, %arg1 : i32, i32
  }
}

</mosaic_0001>

<llo_original>
// kernel: tpu_custom_call.1
$region0: #{tpu_custom_call.1}
  #allocation0 [shape = 'u32[]', space=smem, size = 0x4, offset = 0x4, fixed_abs, tag = 'smem constant byte address 0x4 - core index']
  #allocation1 [shape = 'u32[144,128]{1,0:T(1,128)}', space=vmem, size = 0x12000, scoped, tag = 'internal scratch']
  #allocation2 [shape = 'bf16[16,128]{1,0:T(16,128)(2,1)}', space=vmem, size = 0x1000, scoped, tag = 'scratch operand']
  %s0 = inlined_call_operand.hbm [shape: f32[16,128], index: 0, kind: input, shape index: {}]
  %s1 = inlined_call_operand.hbm [shape: f32[16,128], index: 1, kind: input, shape index: {}]
  %s2 = inlined_call_operand.vmem [shape: f32[1,128], index: 2, kind: input, shape index: {}]
  %s3 = inlined_call_operand.vmem [shape: f32[1,128], index: 3, kind: input, shape index: {}]
  %s4 = inlined_call_operand.hbm [shape: bf16[128,128], index: 4, kind: input, shape index: {}]
  %s5 = inlined_call_operand.vmem [shape: f32[1,128], index: 5, kind: input, shape index: {}]
  %s6 = inlined_call_operand.hbm [shape: f32[16,128], index: 6, kind: output, shape index: {}]
  %s7 = sld [smem:[#allocation0]]
  $region50: #{tpu_custom_call.1} parent=0
    _
  %s9 = ssub.s32 1, %s7
  %s10 = scalar_select 0, %s9, %s7
  $region1: #{tpu_custom_call.1} parent=0
    #allocation3 [shape = 'u8[8192]{0}', space=vmem, size = 0x2000, scoped, tag = 'input window, operand 0, single buffered']
    #allocation4 [shape = 's32[1]{0}', space=sflag, size = 0x4, scoped, tag = 'scoped memory for tpu_custom_call.1']
    #allocation5 [shape = 's32[1]{0}', space=sflag, size = 0x4, scoped, tag = 'scoped memory for tpu_custom_call.1']
    #allocation6 [shape = 'u8[8192]{0}', space=vmem, size = 0x2000, scoped, tag = 'input window, operand 1, single buffered']
    #allocation7 [shape = 's32[1]{0}', space=sflag, size = 0x4, scoped, tag = 'scoped memory for tpu_custom_call.1']
    #allocation8 [shape = 'u8[32768]{0}', space=vmem, size = 0x8000, scoped, tag = 'input window, operand 4, single buffered']
    #allocation9 [shape = 'u8[8192]{0}', space=vmem, size = 0x2000, scoped, tag = 'output window, operand 0, single buffered']
    %11 = vsyncpa [#allocation4], 0
    %12 = vsyncpa [#allocation7], 0
    %13 = vsyncpa [#allocation5], 0
    // Predicated region
    $region2: #{tpu_custom_call.1} parent=1 // pred_check
      _
    $region3: #{tpu_custom_call.1} parent=1 // pred_check_branch
      %15 = sbr.rel (0) target = $region5
    $region4: #{tpu_custom_call.1} parent=1 // pred_region
      %s17 = ssub.s32 256, 256
      %18 = vsyncadd [#allocation4], %s17
      %s19 = sshll.u32 [#allocation3], 4
      %s20 = int_to_ptr.vmem [resolvable:$true] %s19
      %25 = dma.hbm_to_vmem [thread:$0]  %s0, 256, %s20, [#allocation4], 128, 128, 8
    $region5: #{tpu_custom_call.1} parent=1 // pred_fallthru
      _
    // Predicated region
    $region6: #{tpu_custom_call.1} parent=1 // pred_check
      _
    $region7: #{tpu_custom_call.1} parent=1 // pred_check_branch
      %27 = sbr.rel (0) target = $region9
    $region8: #{tpu_custom_call.1} parent=1 // pred_region
      %s29 = ssub.s32 256, 256
      %30 = vsyncadd [#allocation7], %s29
      %s31 = sshll.u32 [#allocation6], 4
      %s32 = int_to_ptr.vmem [resolvable:$true] %s31
      %37 = dma.hbm_to_vmem [thread:$0]  %s1, 256, %s32, [#allocation7], 128, 128, 8
    $region9: #{tpu_custom_call.1} parent=1 // pred_fallthru
      _
    // Predicated region
    $region10: #{tpu_custom_call.1} parent=1 // pred_check
      _
    $region11: #{tpu_custom_call.1} parent=1 // pred_check_branch
      %39 = sbr.rel (0) target = $region13
    $region12: #{tpu_custom_call.1} parent=1 // pred_region
      _
    $region13: #{tpu_custom_call.1} parent=1 // pred_fallthru
      _
    // Predicated region
    $region14: #{tpu_custom_call.1} parent=1 // pred_check
      _
    $region15: #{tpu_custom_call.1} parent=1 // pred_check_branch
      %41 = sbr.rel (0) target = $region17
    $region16: #{tpu_custom_call.1} parent=1 // pred_region
      _
    $region17: #{tpu_custom_call.1} parent=1 // pred_fallthru
      _
    // Predicated region
    $region18: #{tpu_custom_call.1} parent=1 // pred_check
      _
    $region19: #{tpu_custom_call.1} parent=1 // pred_check_branch
      %43 = sbr.rel (0) target = $region21
    $region20: #{tpu_custom_call.1} parent=1 // pred_region
      %s45 = ssub.s32 1024, 1024
      %46 = vsyncadd [#allocation7], %s45
      %s47 = sshll.u32 [#allocation8], 4
      %s48 = int_to_ptr.vmem [resolvable:$true] %s47
      %53 = dma.hbm_to_vmem [thread:$0]  %s4, 1024, %s48, [#allocation7], 64, 64, 4
    $region21: #{tpu_custom_call.1} parent=1 // pred_fallthru
      _
    // Predicated region
    $region22: #{tpu_custom_call.1} parent=1 // pred_check
      _
    $region23: #{tpu_custom_call.1} parent=1 // pred_check_branch
      %55 = sbr.rel (0) target = $region25
    $region24: #{tpu_custom_call.1} parent=1 // pred_region
      _
    $region25: #{tpu_custom_call.1} parent=1 // pred_fallthru
      _
    // Predicated region
    $region26: #{tpu_custom_call.1} parent=1 // pred_check
      _
    $region27: #{tpu_custom_call.1} parent=1 // pred_check_branch
      %57 = sbr.rel (0) target = $region29
    $region28: #{tpu_custom_call.1} parent=1 // pred_region
      %58 = dma.done [#allocation4], 256
    $region29: #{tpu_custom_call.1} parent=1 // pred_fallthru
      _
    // Predicated region
    $region30: #{tpu_custom_call.1} parent=1 // pred_check
      _
    $region31: #{tpu_custom_call.1} parent=1 // pred_check_branch
      %60 = sbr.rel (0) target = $region33
    $region32: #{tpu_custom_call.1} parent=1 // pred_region
      %61 = dma.done [#allocation7], 256
    $region33: #{tpu_custom_call.1} parent=1 // pred_fallthru
      _
    // Predicated region
    $region34: #{tpu_custom_call.1} parent=1 // pred_check
      _
    $region35: #{tpu_custom_call.1} parent=1 // pred_check_branch
      %63 = sbr.rel (0) target = $region37
    $region36: #{tpu_custom_call.1} parent=1 // pred_region
      %64 = dma.done [#allocation7], 1024
    $region37: #{tpu_custom_call.1} parent=1 // pred_fallthru
      _
    %p66 = scmp.eq.s32.totalorder 0, 0
    // Predicated region
    $region38: #{tpu_custom_call.1} parent=1 // pred_check
      %p67 = pneg %p66
    $region39: #{tpu_custom_call.1} parent=1 // pred_check_branch
      %69 = sbr.rel (%p67) target = $region41
    $region40: #{tpu_custom_call.1} parent=1 // pred_region
      %v70 = vld [vmem:[#allocation3] sm:$0xff]
      %v71 = vld [vmem:[#allocation3 + $0x8] sm:$0xff]
      %72 = vadd.xlane.f32.xlu0 %v70
      %v73 = vpop.xlane.xlu0 %72
      %74 = vadd.xlane.f32.xlu0 %v71
      %v75 = vpop.xlane.xlu0 %74
      %v76 = vrcp.pop 128.0
      %v77 = vmul.f32 %v73, %v76
      %v78 = vmul.f32 %v75, %v76
      %v79 = vsub.f32 %v70, %v77
      %v80 = vsub.f32 %v71, %v78
      %v81 = vmul.f32 %v79, %v79
      %v82 = vmul.f32 %v80, %v80
      %83 = vadd.xlane.f32.xlu0 %v81
      %v84 = vpop.xlane.xlu0 %83
      %85 = vadd.xlane.f32.xlu0 %v82
      %v86 = vpop.xlane.xlu0 %85
      %v87 = vmul.f32 %v84, 0.007874016
      %v88 = vmul.f32 %v86, 0.007874016
      %v89 = vrsqrt.pop %v87
      %v90 = vmul.f32 %v87, %v89
      %vm91 = vcmp.eq.f32.partialorder %v87, inf
      %v92 = vsel %vm91, %v87, %v90
      %vm93 = vcmp.eq.f32.partialorder %v87, 0.0
      %v94 = vand.u32 %v87, 2147483648
      %v95 = vsel %vm93, %v94, %v92
      %v96 = vrsqrt.pop %v88
      %v97 = vmul.f32 %v88, %v96
      %vm98 = vcmp.eq.f32.partialorder %v88, inf
      %v99 = vsel %vm98, %v88, %v97
      %vm100 = vcmp.eq.f32.partialorder %v88, 0.0
      %v101 = vand.u32 %v88, 2147483648
      %v102 = vsel %vm100, %v101, %v99
      %v103 = vadd.f32 %v95, 1e-06
      %v104 = vadd.f32 %v102, 1e-06
      %v105 = vrcp.pop %v103
      %v106 = vmul.f32 1.0, %v105
      %v107 = vrcp.pop %v104
      %v108 = vmul.f32 1.0, %v107
      %v109 = vld [vmem:[%s2] sm:$0x1]
      %v110 = vmul.f32 %v79, %v106
      %v111 = vmul.f32 %v80, %v108
      %v113 = vlaneseq
      %v114 = vshrl.u32 %v113, 7
      %v115 = vsub.s32 0, %v114
      %v116 = vrot.slane %v109, %v115
      %v118 = vmul.f32 %v116, %v110
      %v119 = vmul.f32 %v116, %v111
      %v120 = vld [vmem:[%s3] sm:$0x1]
      %v122 = vlaneseq
      %v123 = vshrl.u32 %v122, 7
      %v124 = vsub.s32 0, %v123
      %v125 = vrot.slane %v120, %v124
      %v127 = vadd.f32 %v118, %v125
      %v128 = vadd.f32 %v119, %v125
      %v129 = vpack.c.bf16 %v128, %v127
      %130 = vst [vmem:[#allocation2] sm:$0xff] %v129
    $region41: #{tpu_custom_call.1} parent=1 // pred_fallthru
      _
    %v131 = vld [vmem:[#allocation2] sm:$0xff]
    %v132 = vld [vmem:[#allocation8] sm:$0xf]
    %v133 = vld [vmem:[#allocation8 + $0x4] sm:$0xf]
    %v134 = vld [vmem:[#allocation8 + $0x8] sm:$0xf]
    %v135 = vld [vmem:[#allocation8 + $0xc] sm:$0xf]
    %v136 = vld [vmem:[#allocation8 + $0x10] sm:$0xf]
    %v137 = vld [vmem:[#allocation8 + $0x14] sm:$0xf]
    %v138 = vld [vmem:[#allocation8 + $0x18] sm:$0xf]
    %v139 = vld [vmem:[#allocation8 + $0x1c] sm:$0xf]
    %v140 = vld [vmem:[#allocation8 + $0x20] sm:$0xf]
    %v141 = vld [vmem:[#allocation8 + $0x24] sm:$0xf]
    %v142 = vld [vmem:[#allocation8 + $0x28] sm:$0xf]
    %v143 = vld [vmem:[#allocation8 + $0x2c] sm:$0xf]
    %v144 = vld [vmem:[#allocation8 + $0x30] sm:$0xf]
    %v145 = vld [vmem:[#allocation8 + $0x34] sm:$0xf]
    %v146 = vld [vmem:[#allocation8 + $0x38] sm:$0xf]
    %v147 = vld [vmem:[#allocation8 + $0x3c] sm:$0xf]
    %v148 = vld [vmem:[%s5] sm:$0x1]
    %v150 = vlaneseq
    %v151 = vshrl.u32 %v150, 7
    %v152 = vsub.s32 0, %v151
    %v153 = vrot.slane %v148, %v152
    %v171 = vunpack.c.l.b16 %v132
    %v172 = vunpack.c.l.b16 %v133
    %v173 = vunpack.c.l.b16 %v134
    %v174 = vunpack.c.l.b16 %v135
    %v175 = vunpack.c.l.b16 %v136
    %v176 = vunpack.c.l.b16 %v137
    %v177 = vunpack.c.l.b16 %v138
    %v178 = vunpack.c.l.b16 %v139
    %v179 = vunpack.c.l.b16 %v140
    %v180 = vunpack.c.l.b16 %v141
    %v181 = vunpack.c.l.b16 %v142
    %v182 = vunpack.c.l.b16 %v143
    %v183 = vunpack.c.l.b16 %v144
    %v184 = vunpack.c.l.b16 %v145
    %v185 = vunpack.c.l.b16 %v146
    %v186 = vunpack.c.l.b16 %v147
    %v187 = vpack.c.b16 %v172, %v171
    %v188 = vpack.c.b16 %v174, %v173
    %v189 = vpack.c.b16 %v176, %v175
    %v190 = vpack.c.b16 %v178, %v177
    %v191 = vpack.c.b16 %v180, %v179
    %v192 = vpack.c.b16 %v182, %v181
    %v193 = vpack.c.b16 %v184, %v183
    %v194 = vpack.c.b16 %v186, %v185
    %203 = vmatprep.subr.bf16.mxu0 0
    %204 = vmatpush1.bf16.msra.mxu0 %v187
    %205 = vmatprep.subr.bf16.mxu0 0
    %206 = vmatpush1.bf16.msra.mxu0 %v188
    %207 = vmatprep.subr.bf16.mxu0 0
    %208 = vmatpush1.bf16.msra.mxu0 %v189
    %209 = vmatprep.subr.bf16.mxu0 0
    %210 = vmatpush1.bf16.msra.mxu0 %v190
    %211 = vmatprep.subr.bf16.mxu0 0
    %212 = vmatpush1.bf16.msra.mxu0 %v191
    %213 = vmatprep.subr.bf16.mxu0 0
    %214 = vmatpush1.bf16.msra.mxu0 %v192
    %215 = vmatprep.subr.bf16.mxu0 0
    %216 = vmatpush1.bf16.msra.mxu0 %v193
    %217 = vmatprep.subr.bf16.mxu0 0
    %218 = vmatpush1.bf16.msra.mxu0 %v194
    %219 = vmatprep.subr.bf16.mxu0 0
    %220 = vmatpush1.bf16.msra.mxu0 0
    %221 = vmatprep.subr.bf16.mxu0 0
    %222 = vmatpush1.bf16.msra.mxu0 0
    %223 = vmatprep.subr.bf16.mxu0 0
    %224 = vmatpush1.bf16.msra.mxu0 0
    %225 = vmatprep.subr.bf16.mxu0 0
    %226 = vmatpush1.bf16.msra.mxu0 0
    %227 = vmatprep.subr.bf16.mxu0 0
    %228 = vmatpush1.bf16.msra.mxu0 0
    %229 = vmatprep.subr.bf16.mxu0 0
    %230 = vmatpush1.bf16.msra.mxu0 0
    %231 = vmatprep.subr.bf16.mxu0 0
    %232 = vmatpush1.bf16.msra.mxu0 0
    %233 = vmatprep.subr.bf16.mxu0 0
    %234 = vmatpush1.bf16.msra.mxu0 0
    %235 = vmatprep.mubr.bf16.mxu0 0
    %236 = vmatmul.mubr.bf16.gmra.mrb[0].mxu0 %v131
    %v237 = vpop.f32.mrb[0].mxu0
    %v238 = vadd.f32 %v153, %v237
    %v239 = vpop.f32.mrb[0].mxu0
    %v240 = vpop.f32.mrb[0].mxu0
    %v241 = vadd.f32 %v153, %v240
    %v242 = vpop.f32.mrb[0].mxu0
    %243 = vdwg.mxu0
    %v244 = vld [vmem:[#allocation6] sm:$0xff]
    %v245 = vld [vmem:[#allocation6 + $0x8] sm:$0xff]
    %v246 = vadd.f32 %v244, %v238
    %v247 = vadd.f32 %v245, %v241
    %248 = vst [vmem:[#allocation9] sm:$0xff] %v246
    %249 = vst [vmem:[#allocation9 + $0x8] sm:$0xff] %v247
    // Predicated region
    $region42: #{tpu_custom_call.1} parent=1 // pred_check
      _
    $region43: #{tpu_custom_call.1} parent=1 // pred_check_branch
      %251 = sbr.rel (0) target = $region45
    $region44: #{tpu_custom_call.1} parent=1 // pred_region
      %s253 = ssub.s32 256, 256
      %254 = vsyncadd [#allocation5], %s253
      %s255 = sshll.u32 [#allocation9], 4
      %s256 = int_to_ptr.vmem [resolvable:$true] %s255
      %261 = dma.vmem_to_hbm [thread:$0]  %s256, 256, %s6, [#allocation5], 128, 128, 8
    $region45: #{tpu_custom_call.1} parent=1 // pred_fallthru
      _
    // Predicated region
    $region46: #{tpu_custom_call.1} parent=1 // pred_check
      _
    $region47: #{tpu_custom_call.1} parent=1 // pred_check_branch
      %263 = sbr.rel (0) target = $region49
    $region48: #{tpu_custom_call.1} parent=1 // pred_region
      %264 = dma.done [#allocation5], 256
    $region49: #{tpu_custom_call.1} parent=1 // pred_fallthru
      _
    %265 = vsyncpa [#allocation4], 1
    %266 = vsyncpa [#allocation7], 1
    %267 = vsyncpa [#allocation5], 1

</llo_original>
